<compile_context>
chip_gen: v6e
topology: v6e:2x2x1
jax: 0.10.0
libtpu: 0.0.40
codegen_flags: <defaults>
</compile_context>

<pallas_src>
import jax
import jax.numpy as jnp
from jax.experimental import pallas as pl
from jax.experimental.pallas import tpu as pltpu

_LANES = 128
# Conservative single-block ceiling: 3 resident operands, no double-buffering,
# sized off the smallest scoped-VMEM default (16 MiB v5e, 32 MiB v6e/v7x) with
# headroom so the same threshold is safe on v7x's 64 MiB physical VMEM.
_SINGLE_BLOCK_BYTES = 8 * 1024 * 1024
_GRID_TILE_ROWS = 1024  # (1024, 128) f32 tile = 512 KiB -> ~85% of HBM roofline


def _sublanes_for(dtype):
    # f32 -> 8, bf16/f16 -> 16, int8/fp8 -> 32 (sub-32-bit packs along sublanes).
    itemsize = jnp.dtype(dtype).itemsize
    return 8 * max(1, 4 // max(itemsize, 1))


def _compute_dtype_for(dtype):
    # bf16 has a native VALU path on v6e/v7x: compute directly in bf16 and skip
    # the f32 round-trip (halves VPU work / live vregs). Everything else uses f32
    # (a no-op cast for f32 inputs; correct on v5e which lacks bf16 VALU).
    if dtype == jnp.bfloat16:
        return jnp.bfloat16
    return jnp.float32


def _make_mmetric_kernel(alpha_sen, alpha_spe, compute_dtype):
    # The module "parameters" are plain Python floats -> bake them in as
    # compile-time constants. (If alphas were trainable / runtime-varying they
    # should instead be passed as SMEM scalars to avoid retraces.)
    a_sen = float(alpha_sen)
    a_spe = float(alpha_spe)

    def kernel(sen_ref, spe_ref, out_ref):
        sen = sen_ref[...].astype(compute_dtype)
        spe = spe_ref[...].astype(compute_dtype)
        out_ref[...] = (a_sen * sen + a_spe * spe).astype(out_ref.dtype)

    return kernel


def mmetric(sen, spe, alpha_sen, alpha_spe):
    """alpha_sen * sen + alpha_spe * spe, computed in a Pallas TPU kernel.

    NOTE: standalone, this op is dominated by fixed pallas_call / DMA-setup
    cost; if it ever sits next to other XLA work, the plain jnp expression
    fused by XLA is cheaper. This is the dedicated-op implementation requested.
    """
    assert sen.shape == spe.shape and sen.dtype == spe.dtype
    orig_shape = sen.shape
    dtype = sen.dtype
    itemsize = jnp.dtype(dtype).itemsize
    n = sen.size

    # Lane-dense, sublane-aligned 2-D slab (rows, 128): aligned rows give
    # unmasked vst output stores instead of masked vst.msk partial stores.
    sub = _sublanes_for(dtype)
    rows = pl.cdiv(pl.cdiv(n, _LANES), sub) * sub
    pad = rows * _LANES - n

    sen_flat = sen.reshape(-1)
    spe_flat = spe.reshape(-1)
    if pad:
        # TODO(synk): for large non-divisible inputs this materializes padded
        # copies of both inputs (plus an output slice); a masked last-block
        # path would avoid the extra HBM traffic.
        sen_flat = jnp.pad(sen_flat, (0, pad))
        spe_flat = jnp.pad(spe_flat, (0, pad))
    sen2 = sen_flat.reshape(rows, _LANES)
    spe2 = spe_flat.reshape(rows, _LANES)

    kernel = _make_mmetric_kernel(alpha_sen, alpha_spe, _compute_dtype_for(dtype))
    cost = pl.CostEstimate(flops=3 * n, transcendentals=0,
                           bytes_accessed=3 * n * itemsize)
    slab_bytes = 3 * rows * _LANES * itemsize

    if slab_bytes <= _SINGLE_BLOCK_BYTES:
        # Small path: whole slab as one un-pipelined VMEM block (no grid, so no
        # per-step pipeline bookkeeping on a 1-step grid).
        out2 = pl.pallas_call(
            kernel,
            out_shape=jax.ShapeDtypeStruct((rows, _LANES), dtype),
            in_specs=[pl.BlockSpec(memory_space=pltpu.MemorySpace.VMEM),
                      pl.BlockSpec(memory_space=pltpu.MemorySpace.VMEM)],
            out_specs=pl.BlockSpec(memory_space=pltpu.MemorySpace.VMEM),
            cost_estimate=cost,
        )(sen2, spe2)
    else:
        # Large path: 1-D grid over rows with big double-buffered tiles; the
        # "parallel" axis shards across v7x's 2 TensorCores and enables DMA /
        # compute overlap on v5e/v6e.
        spec = pl.BlockSpec((_GRID_TILE_ROWS, _LANES), lambda i: (i, 0))
        out2 = pl.pallas_call(
            kernel,
            out_shape=jax.ShapeDtypeStruct((rows, _LANES), dtype),
            grid=(pl.cdiv(rows, _GRID_TILE_ROWS),),
            in_specs=[spec, spec],
            out_specs=spec,
            compiler_params=pltpu.CompilerParams(
                dimension_semantics=("parallel",)),
            cost_estimate=cost,
        )(sen2, spe2)

    out_flat = out2.reshape(-1)
    if pad:
        out_flat = out_flat[:n]
    return out_flat.reshape(orig_shape)


if __name__ == "__main__":
    # Deterministic "parameters" of the module.
    alpha_sen = 0.7
    alpha_spe = 0.3

    key = jax.random.PRNGKey(0)
    k1, k2 = jax.random.split(key)
    sen = jax.random.normal(k1, (2, 4, 16, 16), dtype=jnp.float32)  # NCHW
    spe = jax.random.normal(k2, (2, 4, 16, 16), dtype=jnp.float32)  # NCHW

    out = mmetric(sen, spe, alpha_sen, alpha_spe)
    out = jax.block_until_ready(out)

    ref = alpha_sen * sen + alpha_spe * spe
    assert out.shape == sen.shape and out.dtype == sen.dtype
    assert jnp.allclose(out, ref, atol=1e-6, rtol=1e-6)

    print("KERNEL_OK")
</pallas_src>

<mosaic_0001>
module attributes {stable_mosaic.version = 11 : i64} {
  func.func @kernel(%arg0: memref<16x128xf32, #tpu.memory_space<vmem>>, %arg1: memref<16x128xf32, #tpu.memory_space<vmem>>, %arg2: memref<16x128xf32, #tpu.memory_space<vmem>>) attributes {dimension_semantics = [], scalar_prefetch = 0 : i64, scratch_operands = 0 : i64, tpu.core_type = #tpu.core_type<tc>} {
    %c0 = arith.constant 0 : index
    %c0_0 = arith.constant 0 : index
    %0 = vector.load %arg0[%c0, %c0_0] : memref<16x128xf32, #tpu.memory_space<vmem>>, vector<16x128xf32>
    %c0_1 = arith.constant 0 : index
    %c0_2 = arith.constant 0 : index
    %1 = vector.load %arg1[%c0_1, %c0_2] : memref<16x128xf32, #tpu.memory_space<vmem>>, vector<16x128xf32>
    %cst = arith.constant 0.699999988 : f32
    %2 = vector.broadcast %cst : f32 to vector<16x128xf32>
    %3 = arith.mulf %2, %0 : vector<16x128xf32>
    %cst_3 = arith.constant 3.000000e-01 : f32
    %4 = vector.broadcast %cst_3 : f32 to vector<16x128xf32>
    %5 = arith.mulf %4, %1 : vector<16x128xf32>
    %6 = arith.addf %3, %5 : vector<16x128xf32>
    %c0_4 = arith.constant 0 : index
    %c0_5 = arith.constant 0 : index
    %7 = vector.load %arg2[%c0_4, %c0_5] : memref<16x128xf32, #tpu.memory_space<vmem>>, vector<16x128xf32>
    tpu.vector_store %arg2[%c0_4, %c0_5], %6 {strides = array<i32>} : memref<16x128xf32, #tpu.memory_space<vmem>>, vector<16x128xf32>,
    return
  }
}

</mosaic_0001>

<llo_original>
// kernel: tpu_custom_call.1
$region0: #{tpu_custom_call.1}
  #allocation0 [shape = 'u32[]', space=smem, size = 0x4, offset = 0x4, fixed_abs, tag = 'smem constant byte address 0x4 - core index']
  #allocation1 [shape = 'u32[144,128]{1,0:T(1,128)}', space=vmem, size = 0x12000, scoped, tag = 'internal scratch']
  %s0 = inlined_call_operand.hbm [shape: f32[16,128], index: 0, kind: input, shape index: {}]
  %s1 = inlined_call_operand.hbm [shape: f32[16,128], index: 1, kind: input, shape index: {}]
  %s2 = inlined_call_operand.hbm [shape: f32[16,128], index: 2, kind: output, shape index: {}]
  %s3 = sld [smem:[#allocation0]]
  $region26: #{tpu_custom_call.1} parent=0
    _
  %s5 = ssub.s32 1, %s3
  %s6 = scalar_select 0, %s5, %s3
  $region1: #{tpu_custom_call.1} parent=0
    #allocation2 [shape = 'u8[8192]{0}', space=vmem, size = 0x2000, scoped, tag = 'input window, operand 0, single buffered']
    #allocation3 [shape = 's32[1]{0}', space=sflag, size = 0x4, scoped, tag = 'scoped memory for tpu_custom_call.1']
    #allocation4 [shape = 's32[1]{0}', space=sflag, size = 0x4, scoped, tag = 'scoped memory for tpu_custom_call.1']
    #allocation5 [shape = 'u8[8192]{0}', space=vmem, size = 0x2000, scoped, tag = 'input window, operand 1, single buffered']
    #allocation6 [shape = 's32[1]{0}', space=sflag, size = 0x4, scoped, tag = 'scoped memory for tpu_custom_call.1']
    #allocation7 [shape = 'u8[8192]{0}', space=vmem, size = 0x2000, scoped, tag = 'output window, operand 0, single buffered']
    %7 = vsyncpa [#allocation3], 0
    %8 = vsyncpa [#allocation6], 0
    %9 = vsyncpa [#allocation4], 0
    // Predicated region
    $region2: #{tpu_custom_call.1} parent=1 // pred_check
      _
    $region3: #{tpu_custom_call.1} parent=1 // pred_check_branch
      %11 = sbr.rel (0) target = $region5
    $region4: #{tpu_custom_call.1} parent=1 // pred_region
      %s13 = ssub.s32 256, 256
      %14 = vsyncadd [#allocation3], %s13
      %s15 = sshll.u32 [#allocation2], 4
      %s16 = int_to_ptr.vmem [resolvable:$true] %s15
      %21 = dma.hbm_to_vmem [thread:$0]  %s0, 256, %s16, [#allocation3], 128, 128, 8
    $region5: #{tpu_custom_call.1} parent=1 // pred_fallthru
      _
    // Predicated region
    $region6: #{tpu_custom_call.1} parent=1 // pred_check
      _
    $region7: #{tpu_custom_call.1} parent=1 // pred_check_branch
      %23 = sbr.rel (0) target = $region9
    $region8: #{tpu_custom_call.1} parent=1 // pred_region
      %s25 = ssub.s32 256, 256
      %26 = vsyncadd [#allocation6], %s25
      %s27 = sshll.u32 [#allocation5], 4
      %s28 = int_to_ptr.vmem [resolvable:$true] %s27
      %33 = dma.hbm_to_vmem [thread:$0]  %s1, 256, %s28, [#allocation6], 128, 128, 8
    $region9: #{tpu_custom_call.1} parent=1 // pred_fallthru
      _
    // Predicated region
    $region10: #{tpu_custom_call.1} parent=1 // pred_check
      _
    $region11: #{tpu_custom_call.1} parent=1 // pred_check_branch
      %35 = sbr.rel (0) target = $region13
    $region12: #{tpu_custom_call.1} parent=1 // pred_region
      %36 = dma.done [#allocation3], 256
    $region13: #{tpu_custom_call.1} parent=1 // pred_fallthru
      _
    // Predicated region
    $region14: #{tpu_custom_call.1} parent=1 // pred_check
      _
    $region15: #{tpu_custom_call.1} parent=1 // pred_check_branch
      %38 = sbr.rel (0) target = $region17
    $region16: #{tpu_custom_call.1} parent=1 // pred_region
      %39 = dma.done [#allocation6], 256
    $region17: #{tpu_custom_call.1} parent=1 // pred_fallthru
      _
    %v40 = vld [vmem:[#allocation2] sm:$0xff]
    %v41 = vld [vmem:[#allocation2 + $0x8] sm:$0xff]
    %v42 = vld [vmem:[#allocation5] sm:$0xff]
    %v43 = vld [vmem:[#allocation5 + $0x8] sm:$0xff]
    %v44 = vmul.f32 %v40, 0.7
    %v45 = vmul.f32 %v41, 0.7
    %v46 = vmul.f32 %v42, 0.3
    %v47 = vmul.f32 %v43, 0.3
    %v48 = vadd.f32 %v44, %v46
    %v49 = vadd.f32 %v45, %v47
    %50 = vst [vmem:[#allocation7] sm:$0xff] %v48
    %51 = vst [vmem:[#allocation7 + $0x8] sm:$0xff] %v49
    // Predicated region
    $region18: #{tpu_custom_call.1} parent=1 // pred_check
      _
    $region19: #{tpu_custom_call.1} parent=1 // pred_check_branch
      %53 = sbr.rel (0) target = $region21
    $region20: #{tpu_custom_call.1} parent=1 // pred_region
      %s55 = ssub.s32 256, 256
      %56 = vsyncadd [#allocation4], %s55
      %s57 = sshll.u32 [#allocation7], 4
      %s58 = int_to_ptr.vmem [resolvable:$true] %s57
      %63 = dma.vmem_to_hbm [thread:$0]  %s58, 256, %s2, [#allocation4], 128, 128, 8
    $region21: #{tpu_custom_call.1} parent=1 // pred_fallthru
      _
    // Predicated region
    $region22: #{tpu_custom_call.1} parent=1 // pred_check
      _
    $region23: #{tpu_custom_call.1} parent=1 // pred_check_branch
      %65 = sbr.rel (0) target = $region25
    $region24: #{tpu_custom_call.1} parent=1 // pred_region
      %66 = dma.done [#allocation4], 256
    $region25: #{tpu_custom_call.1} parent=1 // pred_fallthru
      _
    %67 = vsyncpa [#allocation3], 1
    %68 = vsyncpa [#allocation6], 1
    %69 = vsyncpa [#allocation4], 1

</llo_original>
